<compile_context>
chip_gen: v6e
topology: v6e:2x2x1
jax: 0.10.0
libtpu: 0.0.40
codegen_flags: <defaults>
</compile_context>

<pallas_src>
import math

import jax
import jax.numpy as jnp
from jax.experimental import pallas as pl
from jax.experimental.pallas import tpu as pltpu


# ----------------------------------------------------------------------------
# helpers
# ----------------------------------------------------------------------------
def _round_up(x, m):
    return ((x + m - 1) // m) * m


def _proj_vmem_bytes(tm, df, dt, dh, h_bytes, z_bytes):
    act = 2 * tm * (df * h_bytes + dt * z_bytes)            # double-buffered tiles
    wts = 2 * ((df * dh + dh * dt) * 2 + (dh + dt) * 4)     # resident bf16 weights
    tmp = tm * (dh * 6 + dt * 6 + 64)                       # f32/bf16 intermediates
    return act + wts + tmp


def _choose_proj_row_tile(bn, df, dt, dh, h_bytes, z_bytes,
                          budget=36 * 1024 * 1024):
    tm = min(512, _round_up(bn, 8))
    while True:
        est = _proj_vmem_bytes(tm, df, dt, dh, h_bytes, z_bytes)
        if est <= budget or tm <= 8:
            return tm, est
        tm = max(8, _round_up(tm // 2, 8))


def _mse_vmem_bytes(tr, tn, in_bytes):
    return 2 * 2 * tr * tn * in_bytes + 2 * tr * tn * 4 + 4096


def _choose_mse_row_tile(rows, tn, in_bytes, budget=36 * 1024 * 1024):
    tr = min(256, _round_up(rows, 8))
    while True:
        est = _mse_vmem_bytes(tr, tn, in_bytes)
        if est <= budget or tr <= 8:
            return tr, est
        tr = max(8, _round_up(tr // 2, 8))


def _vmem_limit(est):
    return int(min(64 * 1024 * 1024, max(32 * 1024 * 1024, int(1.5 * est))))


# ----------------------------------------------------------------------------
# Kernel 1: Projection-alignment loss (all hook layers fused, token-tiled).
# ----------------------------------------------------------------------------
def projection_alignment_loss(hook_stack, fx, w1, b1, w2, b2):
    """hook_stack: [L, B, N, Df]; fx: [B, N, Dt].  Returns sum over layers of
    -mean_token cos_sim(MLP(hook), fx)."""
    L, B, N, Df = hook_stack.shape
    Dt = fx.shape[-1]
    Dh = w1.shape[-1]
    BN = B * N

    h3 = hook_stack.reshape(L, BN, Df)          # keep incoming dtype (no pre-cast)
    z2 = fx.reshape(BN, Dt)

    tm, est = _choose_proj_row_tile(BN, Df, Dt, Dh,
                                    h3.dtype.itemsize, z2.dtype.itemsize)
    BN_pad = _round_up(BN, tm)
    if BN_pad != BN:
        # zero-padded rows give cos == 0 (numerator is 0), so they add nothing.
        h3 = jnp.pad(h3, ((0, 0), (0, BN_pad - BN), (0, 0)))
        z2 = jnp.pad(z2, ((0, BN_pad - BN), (0, 0)))
    num_t = BN_pad // tm

    inv_n_tok = 1.0 / float(BN)                 # TRUE token count (not padded)

    def kernel(h_ref, z_ref, w1_ref, b1_ref, w2_ref, b2_ref, o_ref):
        l = pl.program_id(0)
        t = pl.program_id(1)

        @pl.when(jnp.logical_and(l == 0, t == 0))
        def _():
            o_ref[...] = jnp.zeros_like(o_ref)

        # bf16 MXU operands, f32 accumulation; epilogue math in f32.
        h = h_ref[...].astype(jnp.bfloat16)                         # [tm, Df]
        z = z_ref[...].astype(jnp.float32)                          # [tm, Dt]

        hid = jnp.dot(h, w1_ref[...],
                      preferred_element_type=jnp.float32) + b1_ref[...]
        hid = hid * jax.nn.sigmoid(hid)                             # SiLU (EUP)
        p = jnp.dot(hid.astype(jnp.bfloat16), w2_ref[...],
                    preferred_element_type=jnp.float32) + b2_ref[...]

        eps = jnp.float32(1e-8)
        pz = jnp.sum(p * z, axis=-1, keepdims=True)
        pn = jnp.maximum(jnp.sqrt(jnp.sum(p * p, axis=-1, keepdims=True)), eps)
        zn = jnp.maximum(jnp.sqrt(jnp.sum(z * z, axis=-1, keepdims=True)), eps)
        cos = pz * pl.reciprocal(pn * zn, approx=True)              # [tm, 1]

        o_ref[...] += jnp.sum(cos, axis=0, keepdims=True)

        @pl.when(jnp.logical_and(l == pl.num_programs(0) - 1,
                                 t == pl.num_programs(1) - 1))
        def _():
            o_ref[...] = -o_ref[...] * jnp.float32(inv_n_tok)

    out = pl.pallas_call(
        kernel,
        out_shape=jax.ShapeDtypeStruct((1, 1), jnp.float32),
        grid=(L, num_t),
        in_specs=[
            pl.BlockSpec((None, tm, Df), lambda l, t: (l, t, 0)),   # hook tile
            pl.BlockSpec((tm, Dt), lambda l, t: (t, 0)),            # fx tile
            pl.BlockSpec((Df, Dh), lambda l, t: (0, 0)),            # resident w1
            pl.BlockSpec((1, Dh), lambda l, t: (0, 0)),             # resident b1
            pl.BlockSpec((Dh, Dt), lambda l, t: (0, 0)),            # resident w2
            pl.BlockSpec((1, Dt), lambda l, t: (0, 0)),             # resident b2
        ],
        out_specs=pl.BlockSpec((1, 1), lambda l, t: (0, 0)),
        compiler_params=pltpu.CompilerParams(
            dimension_semantics=("arbitrary", "arbitrary"),
            vmem_limit_bytes=_vmem_limit(est)),
    )(h3, z2, w1, b1, w2, b2)
    return out[0, 0]


# ----------------------------------------------------------------------------
# Kernel 2: Weighted reconstruction MSE:  mean( w_b * (p - t)^2 )
# ----------------------------------------------------------------------------
def weighted_mse_loss(preds, targets, weights):
    B = preds.shape[0]
    M = math.prod(preds.shape[1:])

    p2 = preds.reshape(B, M)                    # keep incoming dtype
    t2 = targets.reshape(B, M)
    wv = weights.reshape(B).astype(jnp.float32)

    # Lane-dense layout: split each batch row into chunks of tn (multiple of
    # 128) and stack chunks along the sublane axis.
    tn = 2048 if M >= 2048 else _round_up(M, 128)
    M_pad = _round_up(M, tn)
    if M_pad != M:
        p2 = jnp.pad(p2, ((0, 0), (0, M_pad - M)))
        t2 = jnp.pad(t2, ((0, 0), (0, M_pad - M)))
    chunks = M_pad // tn
    R = B * chunks
    p3 = p2.reshape(R, tn)
    t3 = t2.reshape(R, tn)
    w_rows = jnp.repeat(wv, chunks).reshape(R, 1)

    tr, est = _choose_mse_row_tile(R, tn, preds.dtype.itemsize)
    R_pad = _round_up(R, tr)
    if R_pad != R:
        p3 = jnp.pad(p3, ((0, R_pad - R), (0, 0)))
        t3 = jnp.pad(t3, ((0, R_pad - R), (0, 0)))
        w_rows = jnp.pad(w_rows, ((0, R_pad - R), (0, 0)))
    num_r = R_pad // tr

    inv_count = 1.0 / float(B * M)              # TRUE element count

    def kernel(p_ref, t_ref, w_ref, o_ref):
        r = pl.program_id(0)

        @pl.when(r == 0)
        def _():
            o_ref[...] = jnp.zeros_like(o_ref)

        d = p_ref[...].astype(jnp.float32) - t_ref[...].astype(jnp.float32)
        row = jnp.sum(d * d, axis=-1, keepdims=True)            # [tr, 1]
        o_ref[...] += jnp.sum(row * w_ref[...], axis=0, keepdims=True)

        @pl.when(r == pl.num_programs(0) - 1)
        def _():
            o_ref[...] = o_ref[...] * jnp.float32(inv_count)

    out = pl.pallas_call(
        kernel,
        out_shape=jax.ShapeDtypeStruct((1, 1), jnp.float32),
        grid=(num_r,),
        in_specs=[
            pl.BlockSpec((tr, tn), lambda r: (r, 0)),
            pl.BlockSpec((tr, tn), lambda r: (r, 0)),
            pl.BlockSpec((tr, 1), lambda r: (r, 0)),
        ],
        out_specs=pl.BlockSpec((1, 1), lambda r: (0, 0)),
        compiler_params=pltpu.CompilerParams(
            dimension_semantics=("arbitrary",),
            vmem_limit_bytes=_vmem_limit(est)),
    )(p3, t3, w_rows)
    return out[0, 0]


# ----------------------------------------------------------------------------
# REPALoss wrapper (parameters initialized deterministically in-script)
# ----------------------------------------------------------------------------
class REPALossPallas:
    def __init__(self, feature_dim, target_dim, proj_hidden_dim=64,
                 proj_weight=0.5, rec_weight=1.0, seed=0):
        k1, k2 = jax.random.split(jax.random.PRNGKey(seed))
        s1 = 1.0 / math.sqrt(feature_dim)
        s2 = 1.0 / math.sqrt(proj_hidden_dim)
        # Projector MLP weights (Linear -> SiLU -> Linear).
        w1 = jax.random.uniform(k1, (feature_dim, proj_hidden_dim),
                                jnp.float32, -s1, s1)
        w2 = jax.random.uniform(k2, (proj_hidden_dim, target_dim),
                                jnp.float32, -s2, s2)
        # Pad the hidden dim to a multiple of 128 (full MXU lanes). Zero pad is
        # exactly equivalent: SiLU(0)=0 contributes nothing through w2.
        dh_pad = _round_up(proj_hidden_dim, 128)
        w1 = jnp.pad(w1, ((0, 0), (0, dh_pad - proj_hidden_dim)))
        w2 = jnp.pad(w2, ((0, dh_pad - proj_hidden_dim), (0, 0)))
        # bf16 MXU operands; biases stay f32 (added post-accumulation).
        self.w1 = w1.astype(jnp.bfloat16)
        self.b1 = jnp.zeros((1, dh_pad), jnp.float32)
        self.w2 = w2.astype(jnp.bfloat16)
        self.b2 = jnp.zeros((1, target_dim), jnp.float32)
        self.proj_weight = proj_weight
        self.rec_weight = rec_weight

    def __call__(self, train_output):
        preds = train_output['preds']
        targets = train_output['targets']
        weights = train_output.get('weights', None)
        hook_fx = train_output['hook_fx']
        fx = train_output['fx']

        # TODO(synk): DinoV2Patch feature extractor has no clean Pallas
        #             equivalent here; `fx` is assumed to be pre-extracted
        #             target features.

        # Fuse all hook layers into ONE pallas_call (single launch, weights and
        # fx DMA'd once, layer axis on the grid).
        hook_stack = jnp.stack([hook_fx[k] for k in hook_fx], axis=0)
        loss_proj = projection_alignment_loss(hook_stack, fx,
                                              self.w1, self.b1,
                                              self.w2, self.b2)

        if weights is None:
            weights = jnp.ones((preds.shape[0],), jnp.float32)
        loss_rec = weighted_mse_loss(preds, targets, weights)

        loss_total = self.proj_weight * loss_proj + self.rec_weight * loss_rec
        return loss_total, {'proj': loss_proj, 'recon': loss_rec}


if __name__ == "__main__":
    key = jax.random.PRNGKey(0)
    kp, kt, kw, kh1, kh2, kf = jax.random.split(key, 6)

    B, C, H, W = 2, 4, 16, 16          # preds / targets (NCHW, as in PyTorch)
    N = 8                              # tokens per sample (hook features)
    feature_dim = 32                   # model feature dim
    target_dim = 64                    # alignment target dim

    preds = jax.random.normal(kp, (B, C, H, W), jnp.float32)
    targets = jax.random.normal(kt, (B, C, H, W), jnp.float32)
    weights = jax.random.uniform(kw, (B,), jnp.float32, 0.5, 1.5)
    hook_fx = {
        "layer_4": jax.random.normal(kh1, (B, N, feature_dim), jnp.float32),
        "layer_8": jax.random.normal(kh2, (B, N, feature_dim), jnp.float32),
    }
    fx = jax.random.normal(kf, (B, N, target_dim), jnp.float32)

    loss_mod = REPALossPallas(feature_dim, target_dim,
                              proj_weight=0.5, rec_weight=1.0, seed=0)

    train_output = {"preds": preds, "targets": targets, "weights": weights,
                    "hook_fx": hook_fx, "fx": fx}

    loss_total, parts = loss_mod(train_output)
    jax.block_until_ready(loss_total)
    jax.block_until_ready(parts["proj"])
    jax.block_until_ready(parts["recon"])
    print("KERNEL_OK")
</pallas_src>

<mosaic_0001>
module attributes {stable_mosaic.version = 11 : i64} {
  func.func @kernel(%arg0: i32, %arg1: i32, %arg2: memref<1x16x32xf32, #tpu.memory_space<vmem>>, %arg3: memref<16x64xf32, #tpu.memory_space<vmem>>, %arg4: memref<32x128xbf16, #tpu.memory_space<vmem>>, %arg5: memref<1x128xf32, #tpu.memory_space<vmem>>, %arg6: memref<128x64xbf16, #tpu.memory_space<vmem>>, %arg7: memref<1x64xf32, #tpu.memory_space<vmem>>, %arg8: memref<1x1xf32, #tpu.memory_space<vmem>>) attributes {dimension_semantics = [#tpu.dimension_semantics<arbitrary>, #tpu.dimension_semantics<arbitrary>], iteration_bounds = array<i64: 2, 1>, scalar_prefetch = 0 : i64, scratch_operands = 0 : i64, tpu.core_type = #tpu.core_type<tc>, window_params = [{transform_indices = @transform_0, window_bounds = array<i64: 1, 16, 32>}, {transform_indices = @transform_1, window_bounds = array<i64: 16, 64>}, {pipeline_mode = #tpu.pipeline_mode<synchronous>, transform_indices = @transform_2, window_bounds = array<i64: 32, 128>}, {pipeline_mode = #tpu.pipeline_mode<synchronous>, transform_indices = @transform_3, window_bounds = array<i64: 1, 128>}, {pipeline_mode = #tpu.pipeline_mode<synchronous>, transform_indices = @transform_4, window_bounds = array<i64: 128, 64>}, {pipeline_mode = #tpu.pipeline_mode<synchronous>, transform_indices = @transform_5, window_bounds = array<i64: 1, 64>}, {pipeline_mode = #tpu.pipeline_mode<synchronous>, transform_indices = @transform_6, window_bounds = array<i64: 1, 1>}]} {
    %c0_i32 = arith.constant 0 : i32
    %0 = arith.cmpi eq, %arg0, %c0_i32 : i32
    %c0_i32_0 = arith.constant 0 : i32
    %1 = arith.cmpi eq, %arg1, %c0_i32_0 : i32
    %2 = arith.andi %0, %1 : i1
    %3 = arith.extui %2 : i1 to i32
    %c0_i32_1 = arith.constant 0 : i32
    %4 = arith.cmpi ne, %3, %c0_i32_1 : i32
    scf.if %4 {
      %cst_28 = arith.constant 0.000000e+00 : f32
      %54 = vector.broadcast %cst_28 : f32 to vector<1x1xf32>
      %c0_29 = arith.constant 0 : index
      %c0_30 = arith.constant 0 : index
      %55 = vector.load %arg8[%c0_29, %c0_30] : memref<1x1xf32, #tpu.memory_space<vmem>>, vector<1x1xf32>
      tpu.vector_store %arg8[%c0_29, %c0_30], %54 {strides = array<i32>} : memref<1x1xf32, #tpu.memory_space<vmem>>, vector<1x1xf32>,
    } else {
    }
    %c0 = arith.constant 0 : index
    %c0_2 = arith.constant 0 : index
    %c0_3 = arith.constant 0 : index
    %5 = vector.load %arg2[%c0, %c0_2, %c0_3] : memref<1x16x32xf32, #tpu.memory_space<vmem>>, vector<1x16x32xf32>
    %6 = vector.shape_cast %5 : vector<1x16x32xf32> to vector<16x32xf32>
    %7 = arith.truncf %6 : vector<16x32xf32> to vector<16x32xbf16>
    %c0_4 = arith.constant 0 : index
    %c0_5 = arith.constant 0 : index
    %8 = vector.load %arg3[%c0_4, %c0_5] : memref<16x64xf32, #tpu.memory_space<vmem>>, vector<16x64xf32>
    %c0_6 = arith.constant 0 : index
    %c0_7 = arith.constant 0 : index
    %9 = vector.load %arg4[%c0_6, %c0_7] : memref<32x128xbf16, #tpu.memory_space<vmem>>, vector<32x128xbf16>
    %cst = arith.constant dense<0.000000e+00> : vector<16x128xf32>
    %10 = tpu.matmul %7, %9, %cst {dimension_numbers = #tpu.dot_dimension_numbers<[1], [0], [0], [1], [0, 0, 1, 1], [], []>} : vector<16x32xbf16>, vector<32x128xbf16>, vector<16x128xf32> -> vector<16x128xf32>
    %c0_8 = arith.constant 0 : index
    %c0_9 = arith.constant 0 : index
    %11 = vector.load %arg5[%c0_8, %c0_9] : memref<1x128xf32, #tpu.memory_space<vmem>>, vector<1x128xf32>
    %12 = vector.broadcast %11 : vector<1x128xf32> to vector<16x128xf32>
    %13 = arith.addf %10, %12 : vector<16x128xf32>
    %14 = arith.negf %13 : vector<16x128xf32>
    %15 = math.exp %14 : vector<16x128xf32>
    %cst_10 = arith.constant 1.000000e+00 : f32
    %16 = vector.broadcast %cst_10 : f32 to vector<16x128xf32>
    %17 = arith.addf %16, %15 : vector<16x128xf32>
    %18 = arith.divf %16, %17 : vector<16x128xf32>
    %19 = arith.mulf %13, %18 : vector<16x128xf32>
    %20 = arith.truncf %19 : vector<16x128xf32> to vector<16x128xbf16>
    %c0_11 = arith.constant 0 : index
    %c0_12 = arith.constant 0 : index
    %21 = vector.load %arg6[%c0_11, %c0_12] : memref<128x64xbf16, #tpu.memory_space<vmem>>, vector<128x64xbf16>
    %cst_13 = arith.constant dense<0.000000e+00> : vector<16x64xf32>
    %22 = tpu.matmul %20, %21, %cst_13 {dimension_numbers = #tpu.dot_dimension_numbers<[1], [0], [0], [1], [0, 0, 1, 1], [], []>} : vector<16x128xbf16>, vector<128x64xbf16>, vector<16x64xf32> -> vector<16x64xf32>
    %c0_14 = arith.constant 0 : index
    %c0_15 = arith.constant 0 : index
    %23 = vector.load %arg7[%c0_14, %c0_15] : memref<1x64xf32, #tpu.memory_space<vmem>>, vector<1x64xf32>
    %24 = vector.broadcast %23 : vector<1x64xf32> to vector<16x64xf32>
    %25 = arith.addf %22, %24 : vector<16x64xf32>
    %26 = arith.mulf %25, %8 : vector<16x64xf32>
    %cst_16 = arith.constant dense<0.000000e+00> : vector<16xf32>
    %27 = vector.multi_reduction <add>, %26, %cst_16 [1] : vector<16x64xf32> to vector<16xf32>
    %28 = vector.shape_cast %27 : vector<16xf32> to vector<16x1xf32>
    %29 = arith.mulf %25, %25 : vector<16x64xf32>
    %cst_17 = arith.constant dense<0.000000e+00> : vector<16xf32>
    %30 = vector.multi_reduction <add>, %29, %cst_17 [1] : vector<16x64xf32> to vector<16xf32>
    %31 = vector.shape_cast %30 : vector<16xf32> to vector<16x1xf32>
    %32 = math.sqrt %31 : vector<16x1xf32>
    %cst_18 = arith.constant 9.99999993E-9 : f32
    %33 = vector.broadcast %cst_18 : f32 to vector<16x1xf32>
    %34 = arith.maximumf %32, %33 : vector<16x1xf32>
    %35 = arith.mulf %8, %8 : vector<16x64xf32>
    %cst_19 = arith.constant dense<0.000000e+00> : vector<16xf32>
    %36 = vector.multi_reduction <add>, %35, %cst_19 [1] : vector<16x64xf32> to vector<16xf32>
    %37 = vector.shape_cast %36 : vector<16xf32> to vector<16x1xf32>
    %38 = math.sqrt %37 : vector<16x1xf32>
    %cst_20 = arith.constant 9.99999993E-9 : f32
    %39 = vector.broadcast %cst_20 : f32 to vector<16x1xf32>
    %40 = arith.maximumf %38, %39 : vector<16x1xf32>
    %41 = arith.mulf %34, %40 : vector<16x1xf32>
    %42 = tpu.reciprocal %41 {approx = true} : vector<16x1xf32> -> vector<16x1xf32>
    %43 = arith.mulf %28, %42 : vector<16x1xf32>
    %c0_21 = arith.constant 0 : index
    %c0_22 = arith.constant 0 : index
    %44 = vector.load %arg8[%c0_21, %c0_22] : memref<1x1xf32, #tpu.memory_space<vmem>>, vector<1x1xf32>
    %cst_23 = arith.constant dense<0.000000e+00> : vector<1xf32>
    %45 = vector.multi_reduction <add>, %43, %cst_23 [0] : vector<16x1xf32> to vector<1xf32>
    %46 = vector.shape_cast %45 : vector<1xf32> to vector<1x1xf32>
    %47 = arith.addf %44, %46 : vector<1x1xf32>
    %c0_24 = arith.constant 0 : index
    %c0_25 = arith.constant 0 : index
    %48 = vector.load %arg8[%c0_24, %c0_25] : memref<1x1xf32, #tpu.memory_space<vmem>>, vector<1x1xf32>
    tpu.vector_store %arg8[%c0_24, %c0_25], %47 {strides = array<i32>} : memref<1x1xf32, #tpu.memory_space<vmem>>, vector<1x1xf32>,
    %c1_i32 = arith.constant 1 : i32
    %49 = arith.cmpi eq, %arg0, %c1_i32 : i32
    %c0_i32_26 = arith.constant 0 : i32
    %50 = arith.cmpi eq, %arg1, %c0_i32_26 : i32
    %51 = arith.andi %49, %50 : i1
    %52 = arith.extui %51 : i1 to i32
    %c0_i32_27 = arith.constant 0 : i32
    %53 = arith.cmpi ne, %52, %c0_i32_27 : i32
    scf.if %53 {
      %c0_28 = arith.constant 0 : index
      %c0_29 = arith.constant 0 : index
      %54 = vector.load %arg8[%c0_28, %c0_29] : memref<1x1xf32, #tpu.memory_space<vmem>>, vector<1x1xf32>
      %cst_30 = arith.constant 0.000000e+00 : f32
      %55 = vector.broadcast %cst_30 : f32 to vector<1x1xf32>
      %56 = arith.subf %55, %54 : vector<1x1xf32>
      %cst_31 = arith.constant 6.250000e-02 : f32
      %57 = vector.broadcast %cst_31 : f32 to vector<1x1xf32>
      %58 = arith.mulf %56, %57 : vector<1x1xf32>
      %c0_32 = arith.constant 0 : index
      %c0_33 = arith.constant 0 : index
      %59 = vector.load %arg8[%c0_32, %c0_33] : memref<1x1xf32, #tpu.memory_space<vmem>>, vector<1x1xf32>
      tpu.vector_store %arg8[%c0_32, %c0_33], %58 {strides = array<i32>} : memref<1x1xf32, #tpu.memory_space<vmem>>, vector<1x1xf32>,
    } else {
    }
    return
  }
  func.func @transform_0(%arg0: i32, %arg1: i32) -> (i32, i32, i32) {
    %c0_i32 = arith.constant 0 : i32
    %c0_i32_0 = arith.constant 0 : i32
    return %arg0, %arg1, %c0_i32 : i32, i32, i32
  }
  func.func @transform_1(%arg0: i32, %arg1: i32) -> (i32, i32) {
    %c0_i32 = arith.constant 0 : i32
    %c0_i32_0 = arith.constant 0 : i32
    return %arg1, %c0_i32 : i32, i32
  }
  func.func @transform_2(%arg0: i32, %arg1: i32) -> (i32, i32) {
    %c0_i32 = arith.constant 0 : i32
    %c0_i32_0 = arith.constant 0 : i32
    %c0_i32_1 = arith.constant 0 : i32
    return %c0_i32, %c0_i32_0 : i32, i32
  }
  func.func @transform_3(%arg0: i32, %arg1: i32) -> (i32, i32) {
    %c0_i32 = arith.constant 0 : i32
    %c0_i32_0 = arith.constant 0 : i32
    %c0_i32_1 = arith.constant 0 : i32
    return %c0_i32, %c0_i32_0 : i32, i32
  }
  func.func @transform_4(%arg0: i32, %arg1: i32) -> (i32, i32) {
    %c0_i32 = arith.constant 0 : i32
    %c0_i32_0 = arith.constant 0 : i32
    %c0_i32_1 = arith.constant 0 : i32
    return %c0_i32, %c0_i32_0 : i32, i32
  }
  func.func @transform_5(%arg0: i32, %arg1: i32) -> (i32, i32) {
    %c0_i32 = arith.constant 0 : i32
    %c0_i32_0 = arith.constant 0 : i32
    %c0_i32_1 = arith.constant 0 : i32
    return %c0_i32, %c0_i32_0 : i32, i32
  }
  func.func @transform_6(%arg0: i32, %arg1: i32) -> (i32, i32) {
    %c0_i32 = arith.constant 0 : i32
    %c0_i32_0 = arith.constant 0 : i32
    %c0_i32_1 = arith.constant 0 : i32
    return %c0_i32, %c0_i32_0 : i32, i32
  }
}

</mosaic_0001>

<llo_original>
// kernel: tpu_custom_call.1
$region0: #{tpu_custom_call.1}
  #allocation0 [shape = 'u32[]', space=smem, size = 0x4, offset = 0x4, fixed_abs, tag = 'smem constant byte address 0x4 - core index']
  #allocation1 [shape = 'u32[144,128]{1,0:T(1,128)}', space=vmem, size = 0x12000, scoped, tag = 'internal scratch']
  %s0 = inlined_call_operand.vmem [shape: f32[2,16,32], index: 0, kind: input, shape index: {}]
  %s1 = inlined_call_operand.vmem [shape: f32[16,64], index: 1, kind: input, shape index: {}]
  %s2 = inlined_call_operand.vmem [shape: bf16[32,128], index: 2, kind: input, shape index: {}]
  %s3 = inlined_call_operand.vmem [shape: f32[1,128], index: 3, kind: input, shape index: {}]
  %s4 = inlined_call_operand.vmem [shape: bf16[128,64], index: 4, kind: input, shape index: {}]
  %s5 = inlined_call_operand.vmem [shape: f32[1,64], index: 5, kind: input, shape index: {}]
  %s6 = inlined_call_operand.hbm [shape: f32[1,1], index: 6, kind: output, shape index: {}]
  %s7 = sld [smem:[#allocation0]]
  $region65: #{tpu_custom_call.1} parent=0
    _
  %s9 = ssub.s32 1, %s7
  %s10 = scalar_select 0, %s9, %s7
  $region1: #{tpu_custom_call.1} parent=0
    #allocation2 [shape = 'u8[512]{0}', space=vmem, size = 0x400, scoped, tag = 'output window, operand 0, single buffered']
    #allocation3 [shape = 's32[2]{0}', space=sflag, size = 0x8, scoped, tag = 'scoped memory for tpu_custom_call.1']
    %11 = vsyncpa [#allocation3], 0
    loop: start=0, step=1, limit=4
    $region2: #{tpu_custom_call.1} parent=1 // loop_pre_header
      _
    $region3: #{tpu_custom_call.1} parent=1 // loop_header
      %s13 = sphi 0, %s17
      %p14 = scmp.ge.s32.totalorder %s13, 4
      %s20 = sphi 0, %s32
      %s21 = sphi 0, %s28
      %s22 = sphi 0, %s20
      %s23 = sphi 0, %s21
      %s24 = sphi 0, %s22
      %s25 = sphi 0, %s23
      %s37 = sphi 0, %s39
      %s40 = sphi 0, %s37
      %s41 = sphi 0, %s40
      %s57 = sphi 0, %s41
      %s63 = sphi 0, %s65
      %s66 = sphi 0, %s63
      %s67 = sphi 0, %s66
      %s83 = sphi 0, %s67
      %s87 = sphi 0, %s87
      %s89 = sphi 0, %s87
      %s90 = sphi 0, %s89
      %s104 = sphi 0, %s90
      %s108 = sphi 0, %s108
      %s110 = sphi 0, %s108
      %s111 = sphi 0, %s110
      %s125 = sphi 0, %s111
      %s129 = sphi 0, %s129
      %s131 = sphi 0, %s129
      %s132 = sphi 0, %s131
      %s146 = sphi 0, %s132
      %s150 = sphi 0, %s150
      %s152 = sphi 0, %s150
      %s153 = sphi 0, %s152
      %s167 = sphi 0, %s153
      %s171 = sphi 0, %s171
      %s173 = sphi 0, %s171
      %s174 = sphi 0, %s173
      %s188 = sphi 0, %s174
    $region4: #{tpu_custom_call.1} parent=1 // loop_header_branch
      %16 = sbr.rel (%p14) target = $region8
    $region5: #{tpu_custom_call.1} parent=1 // loop_body
      %s18 = ssub.s32 %s13, 1
      %s19 = ssub.s32 %s13, 2
      %s26 = sadd.s32 1, %s21
      %p27 = scmp.ge.s32.totalorder %s26, 1
      %s28 = scalar_select %p27, 0, %s26
      %s29 = sadd.s32 1, %s20
      %s30 = scalar_select %p27, %s29, %s20
      %p31 = scmp.ge.s32.totalorder %s30, 2
      %s32 = scalar_select %p31, 0, %s30
      %s33 = ssub.s32 %s20, %s32
      %s34 = ssub.s32 %s21, %s28
      %s35 = sor.u32 %s33, %s34
      %p36 = scmp.eq.s32.totalorder %s35, 0
      %s38 = sadd.s32 %s37, 1
      %s39 = scalar_select %p36, %s37, %s38
      %p42 = pneg %p36
      %p43 = scmp.eq.s32.totalorder %s13, 1
      %p44 = por %p42, %p43
      %p45 = scmp.ne.s32.totalorder %s37, %s40
      %p46 = scmp.eq.s32.totalorder %s13, 0
      %p47 = por %p45, %p46
      %p48 = scmp.ne.s32.totalorder %s37, %s40
      %p49 = scmp.eq.s32.totalorder %s18, 1
      %p50 = por %p48, %p49
      %p51 = scmp.ne.s32.totalorder %s40, %s41
      %p52 = scmp.eq.s32.totalorder %s18, 0
      %p53 = por %p51, %p52
      %p54 = scmp.ne.s32.totalorder %s40, %s41
      %p55 = scmp.eq.s32.totalorder %s19, 1
      %p56 = por %p54, %p55
      %p58 = scmp.ne.s32.totalorder %s41, %s57
      %p59 = scmp.eq.s32.totalorder %s19, 0
      %p60 = por %p58, %p59
      %s61 = ssub.s32 %s21, %s28
      %p62 = scmp.eq.s32.totalorder %s61, 0
      %s64 = sadd.s32 %s63, 1
      %s65 = scalar_select %p62, %s63, %s64
      %p68 = pneg %p62
      %p69 = scmp.eq.s32.totalorder %s13, 1
      %p70 = por %p68, %p69
      %p71 = scmp.ne.s32.totalorder %s63, %s66
      %p72 = scmp.eq.s32.totalorder %s13, 0
      %p73 = por %p71, %p72
      %p74 = scmp.ne.s32.totalorder %s63, %s66
      %p75 = scmp.eq.s32.totalorder %s18, 1
      %p76 = por %p74, %p75
      %p77 = scmp.ne.s32.totalorder %s66, %s67
      %p78 = scmp.eq.s32.totalorder %s18, 0
      %p79 = por %p77, %p78
      %p80 = scmp.ne.s32.totalorder %s66, %s67
      %p81 = scmp.eq.s32.totalorder %s19, 1
      %p82 = por %p80, %p81
      %p84 = scmp.ne.s32.totalorder %s67, %s83
      %p85 = scmp.eq.s32.totalorder %s19, 0
      %p86 = por %p84, %p85
      %s88 = sadd.s32 %s87, 1
      %p91 = scmp.eq.s32.totalorder %s13, 1
      %p92 = scmp.ne.s32.totalorder %s87, %s89
      %p93 = scmp.eq.s32.totalorder %s13, 0
      %p94 = por %p92, %p93
      %p95 = scmp.ne.s32.totalorder %s87, %s89
      %p96 = scmp.eq.s32.totalorder %s18, 1
      %p97 = por %p95, %p96
      %p98 = scmp.ne.s32.totalorder %s89, %s90
      %p99 = scmp.eq.s32.totalorder %s18, 0
      %p100 = por %p98, %p99
      %p101 = scmp.ne.s32.totalorder %s89, %s90
      %p102 = scmp.eq.s32.totalorder %s19, 1
      %p103 = por %p101, %p102
      %p105 = scmp.ne.s32.totalorder %s90, %s104
      %p106 = scmp.eq.s32.totalorder %s19, 0
      %p107 = por %p105, %p106
      %s109 = sadd.s32 %s108, 1
      %p112 = scmp.eq.s32.totalorder %s13, 1
      %p113 = scmp.ne.s32.totalorder %s108, %s110
      %p114 = scmp.eq.s32.totalorder %s13, 0
      %p115 = por %p113, %p114
      %p116 = scmp.ne.s32.totalorder %s108, %s110
      %p117 = scmp.eq.s32.totalorder %s18, 1
      %p118 = por %p116, %p117
      %p119 = scmp.ne.s32.totalorder %s110, %s111
      %p120 = scmp.eq.s32.totalorder %s18, 0
      %p121 = por %p119, %p120
      %p122 = scmp.ne.s32.totalorder %s110, %s111
      %p123 = scmp.eq.s32.totalorder %s19, 1
      %p124 = por %p122, %p123
      %p126 = scmp.ne.s32.totalorder %s111, %s125
      %p127 = scmp.eq.s32.totalorder %s19, 0
      %p128 = por %p126, %p127
      %s130 = sadd.s32 %s129, 1
      %p133 = scmp.eq.s32.totalorder %s13, 1
      %p134 = scmp.ne.s32.totalorder %s129, %s131
      %p135 = scmp.eq.s32.totalorder %s13, 0
      %p136 = por %p134, %p135
      %p137 = scmp.ne.s32.totalorder %s129, %s131
      %p138 = scmp.eq.s32.totalorder %s18, 1
      %p139 = por %p137, %p138
      %p140 = scmp.ne.s32.totalorder %s131, %s132
      %p141 = scmp.eq.s32.totalorder %s18, 0
      %p142 = por %p140, %p141
      %p143 = scmp.ne.s32.totalorder %s131, %s132
      %p144 = scmp.eq.s32.totalorder %s19, 1
      %p145 = por %p143, %p144
      %p147 = scmp.ne.s32.totalorder %s132, %s146
      %p148 = scmp.eq.s32.totalorder %s19, 0
      %p149 = por %p147, %p148
      %s151 = sadd.s32 %s150, 1
      %p154 = scmp.eq.s32.totalorder %s13, 1
      %p155 = scmp.ne.s32.totalorder %s150, %s152
      %p156 = scmp.eq.s32.totalorder %s13, 0
      %p157 = por %p155, %p156
      %p158 = scmp.ne.s32.totalorder %s150, %s152
      %p159 = scmp.eq.s32.totalorder %s18, 1
      %p160 = por %p158, %p159
      %p161 = scmp.ne.s32.totalorder %s152, %s153
      %p162 = scmp.eq.s32.totalorder %s18, 0
      %p163 = por %p161, %p162
      %p164 = scmp.ne.s32.totalorder %s152, %s153
      %p165 = scmp.eq.s32.totalorder %s19, 1
      %p166 = por %p164, %p165
      %p168 = scmp.ne.s32.totalorder %s153, %s167
      %p169 = scmp.eq.s32.totalorder %s19, 0
      %p170 = por %p168, %p169
      %s172 = sadd.s32 %s171, 1
      %p175 = scmp.eq.s32.totalorder %s13, 1
      %p176 = scmp.ne.s32.totalorder %s171, %s173
      %p177 = scmp.eq.s32.totalorder %s13, 0
      %p178 = por %p176, %p177
      %p179 = scmp.ne.s32.totalorder %s171, %s173
      %p180 = scmp.eq.s32.totalorder %s18, 1
      %p181 = por %p179, %p180
      %p182 = scmp.ne.s32.totalorder %s173, %s174
      %p183 = scmp.eq.s32.totalorder %s18, 0
      %p184 = por %p182, %p183
      %p185 = scmp.ne.s32.totalorder %s173, %s174
      %p186 = scmp.eq.s32.totalorder %s19, 1
      %p187 = por %p185, %p186
      %p189 = scmp.ne.s32.totalorder %s174, %s188
      %p190 = scmp.eq.s32.totalorder %s19, 0
      %p191 = por %p189, %p190
      %p192 = scmp.le.s32.totalorder 1, %s13
      %p193 = scmp.lt.s32.totalorder %s13, 3
      %p194 = pnand %p192, %p193
      %p195 = pneg %p194
      // Predicated region
      $region9: #{tpu_custom_call.1} parent=5 // pred_check
        _
      $region10: #{tpu_custom_call.1} parent=5 // pred_check_branch
        %197 = sbr.rel (%p194) target = $region12
      $region11: #{tpu_custom_call.1} parent=5 // pred_region
        %s198 = ssub.s32 %s13, 1
        // Predicated region
        $region13: #{tpu_custom_call.1} parent=11 // pred_check
          %p199 = pneg %p79
        $region14: #{tpu_custom_call.1} parent=11 // pred_check_branch
          %201 = sbr.rel (%p199) target = $region16
        $region15: #{tpu_custom_call.1} parent=11 // pred_region
          %s202 = smul.u32 2, %s23
          %p203 = scmp.lt.s32.totalorder %s202, 1
          %s204 = scalar_select %p203, %s202, 1
          %s205 = smul.addr %s204, 8
          %s206 = scalar_lea.vmem %s1, %s205
          %s207 = smul.u32 2, %s23
        $region16: #{tpu_custom_call.1} parent=11 // pred_fallthru
          _
        // Predicated region
        $region17: #{tpu_custom_call.1} parent=11 // pred_check
          %p208 = pneg %p100
        $region18: #{tpu_custom_call.1} parent=11 // pred_check_branch
          %210 = sbr.rel (%p208) target = $region20
        $region19: #{tpu_custom_call.1} parent=11 // pred_region
          _
        $region20: #{tpu_custom_call.1} parent=11 // pred_fallthru
          _
        // Predicated region
        $region21: #{tpu_custom_call.1} parent=11 // pred_check
          %p211 = pneg %p121
        $region22: #{tpu_custom_call.1} parent=11 // pred_check_branch
          %213 = sbr.rel (%p211) target = $region24
        $region23: #{tpu_custom_call.1} parent=11 // pred_region
          _
        $region24: #{tpu_custom_call.1} parent=11 // pred_fallthru
          _
        // Predicated region
        $region25: #{tpu_custom_call.1} parent=11 // pred_check
          %p214 = pneg %p142
        $region26: #{tpu_custom_call.1} parent=11 // pred_check_branch
          %216 = sbr.rel (%p214) target = $region28
        $region27: #{tpu_custom_call.1} parent=11 // pred_region
          _
        $region28: #{tpu_custom_call.1} parent=11 // pred_fallthru
          _
        // Predicated region
        $region29: #{tpu_custom_call.1} parent=11 // pred_check
          %p217 = pneg %p163
        $region30: #{tpu_custom_call.1} parent=11 // pred_check_branch
          %219 = sbr.rel (%p217) target = $region32
        $region31: #{tpu_custom_call.1} parent=11 // pred_region
          _
        $region32: #{tpu_custom_call.1} parent=11 // pred_fallthru
          _
      $region12: #{tpu_custom_call.1} parent=5 // pred_fallthru
        _
      %p220 = scmp.lt.s32.totalorder %s13, 2
      // Predicated region
      $region33: #{tpu_custom_call.1} parent=5 // pred_check
        %p221 = pneg %p220
      $region34: #{tpu_custom_call.1} parent=5 // pred_check_branch
        %223 = sbr.rel (%p221) target = $region36
      $region35: #{tpu_custom_call.1} parent=5 // pred_region
        // Predicated region
        $region37: #{tpu_custom_call.1} parent=35 // pred_check
          %p224 = pneg %p47
        $region38: #{tpu_custom_call.1} parent=35 // pred_check_branch
          %226 = sbr.rel (%p224) target = $region40
        $region39: #{tpu_custom_call.1} parent=35 // pred_region
          %s227 = smul.u32 2, %s21
          %p228 = scmp.lt.s32.totalorder %s20, 1
          %s229 = scalar_select %p228, %s20, 1
          %p230 = scmp.lt.s32.totalorder %s227, 1
          %s231 = scalar_select %p230, %s227, 1
          %s232 = smul.addr %s229, 2
          %s233 = sadd.s32 %s231, %s232
          %s234 = smul.addr %s233, 8
          %s235 = scalar_lea.vmem %s0, %s234
          %s236 = smul.u32 2, %s21
        $region40: #{tpu_custom_call.1} parent=35 // pred_fallthru
          _
      $region36: #{tpu_custom_call.1} parent=5 // pred_fallthru
        _
      %p237 = scmp.le.s32.totalorder 1, %s13
      %p238 = scmp.lt.s32.totalorder %s13, 3
      %p239 = pnand %p237, %p238
      %p240 = pneg %p239
      // Predicated region
      $region41: #{tpu_custom_call.1} parent=5 // pred_check
        _
      $region42: #{tpu_custom_call.1} parent=5 // pred_check_branch
        %242 = sbr.rel (%p239) target = $region44
      $region43: #{tpu_custom_call.1} parent=5 // pred_region
        %s243 = ssub.s32 %s13, 1
        %s244 = smul.u32 2, %s23
        %p245 = scmp.lt.s32.totalorder %s22, 1
        %s246 = scalar_select %p245, %s22, 1
        %p247 = scmp.lt.s32.totalorder %s244, 1
        %s248 = scalar_select %p247, %s244, 1
        %s249 = smul.addr %s246, 2
        %s250 = sadd.s32 %s248, %s249
        %s251 = smul.addr %s250, 8
        %s252 = scalar_lea.vmem %s0, %s251
        %p253 = pneg %p53
        %p254 = pneg %p50
        %s255 = smul.u32 2, %s23
        %p256 = scmp.lt.s32.totalorder %s255, 1
        %s257 = scalar_select %p256, %s255, 1
        %s258 = smul.addr %s257, 8
        %s259 = scalar_lea.vmem %s1, %s258
        %p260 = pneg %p79
        %p261 = pneg %p76
        %p262 = pneg %p100
        %p263 = pneg %p97
        %p264 = pneg %p121
        %p265 = pneg %p118
        %p266 = pneg %p142
        %p267 = pneg %p139
        %p268 = pneg %p163
        %p269 = pneg %p160
        %p270 = pneg %p184
        %p271 = pneg %p181
        %s272 = smul.u32 2, %s23
        %p273 = scmp.lt.s32.totalorder %s22, 1
        %s274 = scalar_select %p273, %s22, 1
        %p275 = scmp.lt.s32.totalorder %s272, 1
        %s276 = scalar_select %p275, %s272, 1
        %s277 = smul.addr %s274, 2
        %s278 = sadd.s32 %s276, %s277
        %s279 = smul.addr %s278, 8
        %s280 = scalar_lea.vmem %s0, %s279
        %s281 = smul.u32 2, %s23
        %s282 = smul.u32 2, %s23
        %p283 = scmp.lt.s32.totalorder %s282, 1
        %s284 = scalar_select %p283, %s282, 1
        %s285 = smul.addr %s284, 8
        %s286 = scalar_lea.vmem %s1, %s285
        %s287 = smul.u32 2, %s23
        %p289 = scmp.eq.s32.totalorder %s22, 0
        %p290 = scmp.eq.s32.totalorder %s23, 0
        %p291 = pnand %p289, %p290
        %p292 = pneg %p291
        // Predicated region
        $region45: #{tpu_custom_call.1} parent=43 // pred_check
          _
        $region46: #{tpu_custom_call.1} parent=43 // pred_check_branch
          %294 = sbr.rel (%p291) target = $region48
        $region47: #{tpu_custom_call.1} parent=43 // pred_region
          %vm295 = vcmask 0
          %296 = vst.msk [vmem:[#allocation2] sm:$0x1] %vm295, 0.0
        $region48: #{tpu_custom_call.1} parent=43 // pred_fallthru
          _
        %v297 = vld [vmem:[%s280] sm:$0xff]
        %v298 = vld [vmem:[%s280 + $0x8] sm:$0xff]
        %v299 = vpack.c.bf16 %v298, %v297
        %v300 = vld [vmem:[%s286] sm:$0xff]
        %v301 = vld [vmem:[%s286 + $0x8] sm:$0xff]
        %v302 = vld [vmem:[%s2] sm:$0xf]
        %v303 = vld [vmem:[%s2 + $0x4] sm:$0xf]
        %v304 = vld [vmem:[%s2 + $0x8] sm:$0xf]
        %v305 = vld [vmem:[%s2 + $0xc] sm:$0xf]
        %v306 = vld [vmem:[%s3] sm:$0x1]
        %v308 = vlaneseq
        %v309 = vshrl.u32 %v308, 7
        %v310 = vsub.s32 0, %v309
        %v311 = vrot.slane %v306, %v310
        %v317 = vunpack.c.l.b16 %v302
        %v318 = vunpack.c.l.b16 %v303
        %v319 = vunpack.c.l.b16 %v304
        %v320 = vunpack.c.l.b16 %v305
        %v321 = vpack.c.b16 %v318, %v317
        %v322 = vpack.c.b16 %v320, %v319
        %vm325 = vcmask 261120
        %v327 = vsel %vm325, %v299, 0
        %329 = vmatprep.subr.bf16.mxu0 0
        %330 = vmatpush1.bf16.msra.mxu0 0
        %331 = vmatprep.subr.bf16.mxu0 0
        %332 = vmatpush1.bf16.msra.mxu0 0
        %333 = vmatprep.subr.bf16.mxu0 0
        %334 = vmatpush1.bf16.msra.mxu0 0
        %335 = vmatprep.subr.bf16.mxu0 0
        %336 = vmatpush1.bf16.msra.mxu0 0
        %337 = vmatprep.subr.bf16.mxu0 0
        %338 = vmatpush1.bf16.msra.mxu0 0
        %339 = vmatprep.subr.bf16.mxu0 0
        %340 = vmatpush1.bf16.msra.mxu0 0
        %341 = vmatprep.subr.bf16.mxu0 0
        %342 = vmatpush1.bf16.msra.mxu0 %v322
        %343 = vmatprep.subr.bf16.mxu0 0
        %344 = vmatpush1.bf16.msra.mxu0 %v321
        %345 = vmatprep.subr.bf16.mxu0 0
        %346 = vmatpush2.bf16.msra.mxu0 0
        %347 = vmatprep.subr.bf16.mxu0 0
        %348 = vmatpush2.bf16.msra.mxu0 0
        %349 = vmatprep.subr.bf16.mxu0 0
        %350 = vmatpush2.bf16.msra.mxu0 0
        %351 = vmatprep.subr.bf16.mxu0 0
        %352 = vmatpush2.bf16.msra.mxu0 0
        %353 = vmatprep.subr.bf16.mxu0 0
        %354 = vmatpush2.bf16.msra.mxu0 0
        %355 = vmatprep.subr.bf16.mxu0 0
        %356 = vmatpush2.bf16.msra.mxu0 0
        %357 = vmatprep.subr.bf16.mxu0 0
        %358 = vmatpush2.bf16.msra.mxu0 0
        %359 = vmatprep.subr.bf16.mxu0 0
        %360 = vmatpush2.bf16.msra.mxu0 0
        %361 = vmatprep.mubr.bf16.mxu0 0
        %362 = vmatmul.mubr.bf16.gmra.mxu0 %v327
        %v363 = vpop.f32.mrf.mxu0
        %v364 = vadd.f32 %v311, %v363
        %v365 = vpop.f32.mrf.mxu0
        %v366 = vpop.f32.mrf.mxu0
        %v367 = vadd.f32 %v311, %v366
        %v368 = vpop.f32.mrf.mxu0
        %369 = vdwg.mxu0
        %v370 = vxor.u32 %v364, 2147483648
        %v371 = vxor.u32 %v367, 2147483648
        %v372 = vmul.f32 %v370, 1.442695
        %v373 = vpow.pop %v372
        %v374 = vmul.f32 %v371, 1.442695
        %v375 = vpow.pop %v374
        %v376 = vadd.f32 %v373, 1.0
        %v377 = vadd.f32 %v375, 1.0
        %v378 = vrcp.pop %v376
        %v379 = vmul.f32 1.0, %v378
        %v380 = vrcp.pop %v377
        %v381 = vmul.f32 1.0, %v380
        %v382 = vmul.f32 %v364, %v379
        %v383 = vmul.f32 %v367, %v381
        %v384 = vpack.c.bf16 %v383, %v382
        %v385 = vld [vmem:[%s4] sm:$0xf]
        %v386 = vld [vmem:[%s4 + $0x4] sm:$0xf]
        %v387 = vld [vmem:[%s4 + $0x8] sm:$0xf]
        %v388 = vld [vmem:[%s4 + $0xc] sm:$0xf]
        %v389 = vld [vmem:[%s4 + $0x10] sm:$0xf]
        %v390 = vld [vmem:[%s4 + $0x14] sm:$0xf]
        %v391 = vld [vmem:[%s4 + $0x18] sm:$0xf]
        %v392 = vld [vmem:[%s4 + $0x1c] sm:$0xf]
        %v393 = vld [vmem:[%s4 + $0x20] sm:$0xf]
        %v394 = vld [vmem:[%s4 + $0x24] sm:$0xf]
        %v395 = vld [vmem:[%s4 + $0x28] sm:$0xf]
        %v396 = vld [vmem:[%s4 + $0x2c] sm:$0xf]
        %v397 = vld [vmem:[%s4 + $0x30] sm:$0xf]
        %v398 = vld [vmem:[%s4 + $0x34] sm:$0xf]
        %v399 = vld [vmem:[%s4 + $0x38] sm:$0xf]
        %v400 = vld [vmem:[%s4 + $0x3c] sm:$0xf]
        %v401 = vld [vmem:[%s5] sm:$0x1]
        %v403 = vlaneseq
        %v404 = vshrl.u32 %v403, 7
        %v405 = vsub.s32 0, %v404
        %v406 = vrot.slane %v401, %v405
        %v424 = vunpack.c.l.b16 %v385
        %v425 = vunpack.c.l.b16 %v386
        %v426 = vunpack.c.l.b16 %v387
        %v427 = vunpack.c.l.b16 %v388
        %v428 = vunpack.c.l.b16 %v389
        %v429 = vunpack.c.l.b16 %v390
        %v430 = vunpack.c.l.b16 %v391
        %v431 = vunpack.c.l.b16 %v392
        %v432 = vunpack.c.l.b16 %v393
        %v433 = vunpack.c.l.b16 %v394
        %v434 = vunpack.c.l.b16 %v395
        %v435 = vunpack.c.l.b16 %v396
        %v436 = vunpack.c.l.b16 %v397
        %v437 = vunpack.c.l.b16 %v398
        %v438 = vunpack.c.l.b16 %v399
        %v439 = vunpack.c.l.b16 %v400
        %v440 = vpack.c.b16 %v425, %v424
        %v441 = vpack.c.b16 %v427, %v426
        %v442 = vpack.c.b16 %v429, %v428
        %v443 = vpack.c.b16 %v431, %v430
        %v444 = vpack.c.b16 %v433, %v432
        %v445 = vpack.c.b16 %v435, %v434
        %v446 = vpack.c.b16 %v437, %v436
        %v447 = vpack.c.b16 %v439, %v438
        %456 = vmatprep.subr.bf16.mxu0 0
        %457 = vmatpush1.bf16.msra.mxu0 %v447
        %458 = vmatprep.subr.bf16.mxu0 0
        %459 = vmatpush1.bf16.msra.mxu0 %v446
        %460 = vmatprep.subr.bf16.mxu0 0
        %461 = vmatpush1.bf16.msra.mxu0 %v445
        %462 = vmatprep.subr.bf16.mxu0 0
        %463 = vmatpush1.bf16.msra.mxu0 %v444
        %464 = vmatprep.subr.bf16.mxu0 0
        %465 = vmatpush1.bf16.msra.mxu0 %v443
        %466 = vmatprep.subr.bf16.mxu0 0
        %467 = vmatpush1.bf16.msra.mxu0 %v442
        %468 = vmatprep.subr.bf16.mxu0 0
        %469 = vmatpush1.bf16.msra.mxu0 %v441
        %470 = vmatprep.subr.bf16.mxu0 0
        %471 = vmatpush1.bf16.msra.mxu0 %v440
        %472 = vmatprep.subr.bf16.mxu0 0
        %473 = vmatpush2.bf16.msra.mxu0 0
        %474 = vmatprep.subr.bf16.mxu0 0
        %475 = vmatpush2.bf16.msra.mxu0 0
        %476 = vmatprep.subr.bf16.mxu0 0
        %477 = vmatpush2.bf16.msra.mxu0 0
        %478 = vmatprep.subr.bf16.mxu0 0
        %479 = vmatpush2.bf16.msra.mxu0 0
        %480 = vmatprep.subr.bf16.mxu0 0
        %481 = vmatpush2.bf16.msra.mxu0 0
        %482 = vmatprep.subr.bf16.mxu0 0
        %483 = vmatpush2.bf16.msra.mxu0 0
        %484 = vmatprep.subr.bf16.mxu0 0
        %485 = vmatpush2.bf16.msra.mxu0 0
        %486 = vmatprep.subr.bf16.mxu0 0
        %487 = vmatpush2.bf16.msra.mxu0 0
        %488 = vmatprep.mubr.bf16.mxu0 0
        %489 = vmatmul.mubr.bf16.gmra.mxu0 %v384
        %v490 = vpop.f32.mrf.mxu0
        %v491 = vadd.f32 %v406, %v490
        %v492 = vpop.f32.mrf.mxu0
        %v493 = vpop.f32.mrf.mxu0
        %v494 = vadd.f32 %v406, %v493
        %v495 = vpop.f32.mrf.mxu0
        %496 = vdwg.mxu0
        %v497 = vmul.f32 %v491, %v300
        %v498 = vmul.f32 %v494, %v301
        %vm499 = vcmask 523264
        %v500 = vsel %vm499, %v497, 0.0
        %501 = vadd.xlane.f32.xlu0 %v500
        %v502 = vpop.xlane.xlu0 %501
        %v503 = vsel %vm499, %v498, 0.0
        %504 = vadd.xlane.f32.xlu0 %v503
        %v505 = vpop.xlane.xlu0 %504
        %v506 = vmul.f32 %v491, %v491
        %v507 = vmul.f32 %v494, %v494
        %v508 = vsel %vm499, %v506, 0.0
        %509 = vadd.xlane.f32.xlu0 %v508
        %v510 = vpop.xlane.xlu0 %509
        %v511 = vsel %vm499, %v507, 0.0
        %512 = vadd.xlane.f32.xlu0 %v511
        %v513 = vpop.xlane.xlu0 %512
        %v514 = vrsqrt.pop %v510
        %v515 = vmul.f32 %v510, %v514
        %vm516 = vcmp.eq.f32.partialorder %v510, inf
        %v517 = vsel %vm516, %v510, %v515
        %vm518 = vcmp.eq.f32.partialorder %v510, 0.0
        %v519 = vand.u32 %v510, 2147483648
        %v520 = vsel %vm518, %v519, %v517
        %v521 = vrsqrt.pop %v513
        %v522 = vmul.f32 %v513, %v521
        %vm523 = vcmp.eq.f32.partialorder %v513, inf
        %v524 = vsel %vm523, %v513, %v522
        %vm525 = vcmp.eq.f32.partialorder %v513, 0.0
        %v526 = vand.u32 %v513, 2147483648
        %v527 = vsel %vm525, %v526, %v524
        %v528 = vmax.f32 %v520, 1e-08
        %v529 = vmax.f32 %v527, 1e-08
        %v530 = vmul.f32 %v300, %v300
        %v531 = vmul.f32 %v301, %v301
        %v532 = vsel %vm499, %v530, 0.0
        %533 = vadd.xlane.f32.xlu0 %v532
        %v534 = vpop.xlane.xlu0 %533
        %v535 = vsel %vm499, %v531, 0.0
        %536 = vadd.xlane.f32.xlu0 %v535
        %v537 = vpop.xlane.xlu0 %536
        %v538 = vrsqrt.pop %v534
        %v539 = vmul.f32 %v534, %v538
        %vm540 = vcmp.eq.f32.partialorder %v534, inf
        %v541 = vsel %vm540, %v534, %v539
        %vm542 = vcmp.eq.f32.partialorder %v534, 0.0
        %v543 = vand.u32 %v534, 2147483648
        %v544 = vsel %vm542, %v543, %v541
        %v545 = vrsqrt.pop %v537
        %v546 = vmul.f32 %v537, %v545
        %vm547 = vcmp.eq.f32.partialorder %v537, inf
        %v548 = vsel %vm547, %v537, %v546
        %vm549 = vcmp.eq.f32.partialorder %v537, 0.0
        %v550 = vand.u32 %v537, 2147483648
        %v551 = vsel %vm549, %v550, %v548
        %v552 = vmax.f32 %v544, 1e-08
        %v553 = vmax.f32 %v551, 1e-08
        %v554 = vmul.f32 %v528, %v552
        %v555 = vmul.f32 %v529, %v553
        %v556 = vrcp.pop %v554
        %v557 = vrcp.pop %v555
        %v558 = vmul.f32 %v502, %v556
        %v559 = vmul.f32 %v505, %v557
        %v560 = vld [vmem:[#allocation2] sm:$0x1]
        %v561 = vadd.f32 %v558, %v559
        %v562 = vrot.slane %v561, 4
        %v563 = vadd.f32 %v561, %v562
        %v564 = vrot.slane %v563, 2
        %v565 = vadd.f32 %v563, %v564
        %v566 = vrot.slane %v565, 1
        %v567 = vadd.f32 %v565, %v566
        %v568 = vadd.f32 %v560, %v567
        %vm569 = vcmask 0
        %570 = vst.msk [vmem:[#allocation2] sm:$0x1] %vm569, %v568
        %p571 = scmp.eq.s32.totalorder %s22, 1
        %p572 = pnand %p571, %p290
        %p573 = pneg %p572
        // Predicated region
        $region49: #{tpu_custom_call.1} parent=43 // pred_check
          _
        $region50: #{tpu_custom_call.1} parent=43 // pred_check_branch
          %575 = sbr.rel (%p572) target = $region52
        $region51: #{tpu_custom_call.1} parent=43 // pred_region
          %v576 = vld [vmem:[#allocation2] sm:$0x1]
          %v577 = vsub.f32 0.0, %v576
          %v578 = vmul.f32 %v577, 0.0625
          %579 = vst.msk [vmem:[#allocation2] sm:$0x1] %vm569, %v578
        $region52: #{tpu_custom_call.1} parent=43 // pred_fallthru
          _
        // Predicated region
        $region53: #{tpu_custom_call.1} parent=43 // pred_check
          %p580 = pneg %p181
        $region54: #{tpu_custom_call.1} parent=43 // pred_check_branch
          %582 = sbr.rel (%p580) target = $region56
        $region55: #{tpu_custom_call.1} parent=43 // pred_region
          %s584 = ssub.s32 16, 16
          %585 = vsyncadd [#allocation3], %s584
          %s587 = sshll.u32 [#allocation2], 4
          %s588 = int_to_ptr.vmem [resolvable:$true] %s587
          %590 = dma.vmem_to_hbm [thread:$0]  %s588, 16, %s6, [#allocation3]
        $region56: #{tpu_custom_call.1} parent=43 // pred_fallthru
          _
        // Predicated region
        $region57: #{tpu_custom_call.1} parent=43 // pred_check
          %p591 = pneg %p181
        $region58: #{tpu_custom_call.1} parent=43 // pred_check_branch
          %593 = sbr.rel (%p591) target = $region60
        $region59: #{tpu_custom_call.1} parent=43 // pred_region
          %594 = dma.done [#allocation3], 16
        $region60: #{tpu_custom_call.1} parent=43 // pred_fallthru
          _
      $region44: #{tpu_custom_call.1} parent=5 // pred_fallthru
        _
      %p595 = scmp.le.s32.totalorder 2, %s13
      // Predicated region
      $region61: #{tpu_custom_call.1} parent=5 // pred_check
        %p596 = pneg %p595
      $region62: #{tpu_custom_call.1} parent=5 // pred_check_branch
        %598 = sbr.rel (%p596) target = $region64
      $region63: #{tpu_custom_call.1} parent=5 // pred_region
        %s599 = ssub.s32 %s13, 2
      $region64: #{tpu_custom_call.1} parent=5 // pred_fallthru
        _
    $region6: #{tpu_custom_call.1} parent=1 // loop_footer
      %s17 = sadd.s32 1, %s13
    $region7: #{tpu_custom_call.1} parent=1 // loop_footer_branch
      %12 = sbr.rel target = $region3
    $region8: #{tpu_custom_call.1} parent=1 // loop_exit
      _
    %600 = vsyncpa [#allocation3], 1
    %s601 = scalar_lea.sflag [#allocation3], 1
    %602 = vsyncpa %s601, 1

</llo_original>
